<compile_context>
chip_gen: v7x
topology: tpu7x:2x2x1
jax: 0.10.0
libtpu: 0.0.40
codegen_flags: <defaults>
</compile_context>

<pallas_src>
import functools

import jax
import jax.numpy as jnp
from jax.experimental import pallas as pl
from jax.experimental.pallas import tpu as pltpu

LANE = 128


def _round_up(x, m):
    return (x + m - 1) // m * m


# ----------------------------------------------------------------------------
# Fused kernel: per-batch patch mean-pool + projection + pos/bias add + head
# ----------------------------------------------------------------------------
def _dna_fused_kernel(p_ref, w_ref, posb_ref, wh_ref, o_ref, *, inv_n):
    # p_ref:    (bpt, N, CPP)  bf16  unfolded patches for `bpt` whole batches
    # w_ref:    (CPP, D_pad)   bf16  flattened projection weight (resident)
    # posb_ref: (1, D_pad)     f32   mean(pos_embed) + projection bias (resident)
    # wh_ref:   (D_pad, C_pad) bf16  head weight (resident)
    # o_ref:    (bpt, C_pad)   f32   logits rows for these batches
    #
    # Identity routing => mean over patches commutes with the linear projection,
    # so pool the raw patches first (f32 accumulation on the VPU, which has
    # plenty of slack in this HBM-bound kernel).
    pooled_p = jnp.sum(p_ref[...].astype(jnp.float32), axis=1) * inv_n  # (bpt, CPP)
    pooled = jnp.dot(
        pooled_p.astype(jnp.bfloat16), w_ref[...],
        preferred_element_type=jnp.float32,
    )                                                                    # (bpt, D_pad)
    pooled = pooled + posb_ref[...]          # + mean(pos_embed) + proj bias (f32)
    o_ref[...] = jnp.dot(
        pooled.astype(jnp.bfloat16), wh_ref[...],
        preferred_element_type=jnp.float32,
    ).astype(o_ref.dtype)


# ----------------------------------------------------------------------------
# Glue: NCHW -> (B, N, C*P*P) patch unfold (matches Conv2d(kernel=P, stride=P))
# ----------------------------------------------------------------------------
def extract_patches(x, patch_size):
    B, C, H, W = x.shape
    P = patch_size
    x = x.reshape(B, C, H // P, P, W // P, P)
    x = x.transpose(0, 2, 4, 1, 3, 5)            # (B, H/P, W/P, C, P, P)
    return x.reshape(B, (H // P) * (W // P), C * P * P)


@functools.partial(jax.jit, static_argnames=("patch_size",))
def dna_forward(x, w_patch, b_patch, pos_embed, w_head, *, patch_size):
    """Full DNA forward. x: (B, C, H, W) float32 -> logits (B, num_classes)."""
    B, C, H, W = x.shape
    D = w_patch.shape[0]
    num_classes = w_head.shape[0]
    N = (H // patch_size) * (W // patch_size)
    CPP = C * patch_size * patch_size

    D_pad = _round_up(D, LANE)
    C_pad = _round_up(num_classes, LANE)

    patches = extract_patches(x.astype(jnp.bfloat16), patch_size)   # (B, N, CPP)

    # --- M tiling: whole batches per grid step --------------------------------
    # Target ~2048 patch rows per step (amortizes ~0.35us per-step overhead),
    # bound the bf16 patch stream to ~8 MiB per buffer (double-buffered ->
    # 16 MiB, safe for v7x's 64 MiB VMEM / 32 MiB default scoped limit), keep
    # bpt a multiple of 8 (output sublane rule) and force >= 2 grid steps so the
    # pipeline double-buffers and both v7x TensorCores get work.  Padded batches
    # are zero-filled and sliced off below.
    bytes_per_batch = N * CPP * 2
    bpt = max(1, 2048 // max(N, 1))
    bpt = min(bpt, max(1, (8 * 1024 * 1024) // max(bytes_per_batch, 1)))
    bpt = min(bpt, _round_up(B, 8))
    bpt = max(8, (bpt // 8) * 8)
    B_pad = _round_up(max(B, 2 * bpt), bpt)
    if B_pad != B:
        patches = jnp.pad(patches, ((0, B_pad - B), (0, 0), (0, 0)))
    grid = (B_pad // bpt,)

    # Resident operands: bf16 MXU operands, zero-padded to lane-dense widths.
    # Projection bias and the patch-mean of the positional embedding fold into a
    # single f32 row (exact under identity routing).
    w_proj = (
        jnp.zeros((CPP, D_pad), jnp.bfloat16)
        .at[:, :D]
        .set(w_patch.reshape(D, CPP).T.astype(jnp.bfloat16))
    )
    posb = (
        jnp.zeros((1, D_pad), jnp.float32)
        .at[0, :D]
        .set(pos_embed.mean(axis=0) + b_patch)
    )
    w_head_p = (
        jnp.zeros((D_pad, C_pad), jnp.bfloat16)
        .at[:D, :num_classes]
        .set(w_head.T.astype(jnp.bfloat16))
    )

    kernel = functools.partial(_dna_fused_kernel, inv_n=1.0 / N)
    out = pl.pallas_call(
        kernel,
        out_shape=jax.ShapeDtypeStruct((B_pad, C_pad), jnp.float32),
        grid=grid,
        in_specs=[
            # streamed patch blocks (double-buffered by default)
            pl.BlockSpec((bpt, N, CPP), lambda i: (i, 0, 0)),
            # VMEM-resident operands: constant index_map, single-buffered
            pl.BlockSpec((CPP, D_pad), lambda i: (0, 0),
                         pipeline_mode=pl.Buffered(1)),
            pl.BlockSpec((1, D_pad), lambda i: (0, 0),
                         pipeline_mode=pl.Buffered(1)),
            pl.BlockSpec((D_pad, C_pad), lambda i: (0, 0),
                         pipeline_mode=pl.Buffered(1)),
        ],
        out_specs=pl.BlockSpec((bpt, C_pad), lambda i: (i, 0)),
        compiler_params=pltpu.CompilerParams(
            dimension_semantics=("parallel",)),
    )(patches, w_proj, posb, w_head_p)

    # TODO(synk): router_collection loop (LinearRouter + NestedModuleTokenizer)
    # omitted — internals not provided; tokens pass through unchanged.
    return out[:B, :num_classes]


if __name__ == "__main__":
    # Small, DNA-consistent config.
    B = 2
    in_channels = 4
    image_size = 16
    patch_size = 4
    embed_dim = 32
    num_classes = 8
    num_patches = (image_size // patch_size) ** 2                # 16

    key = jax.random.PRNGKey(0)
    k_x, k_w, k_pos, k_head = jax.random.split(key, 4)

    def trunc_normal(k, shape, std=0.02):
        return (std * jax.random.truncated_normal(k, -2.0, 2.0, shape)).astype(
            jnp.float32
        )

    # Deterministic synthetic parameters (shapes follow the module __init__).
    w_patch = trunc_normal(k_w, (embed_dim, in_channels, patch_size, patch_size))
    b_patch = jnp.zeros((embed_dim,), jnp.float32)
    pos_embed_p = trunc_normal(k_pos, (num_patches, embed_dim))      # (1, N, D) squeezed
    w_head = trunc_normal(k_head, (num_classes, embed_dim))          # nn.Linear, no bias
    x = jax.random.normal(k_x, (B, in_channels, image_size, image_size), jnp.float32)

    logits = dna_forward(
        x, w_patch, b_patch, pos_embed_p, w_head, patch_size=patch_size
    )
    logits = jax.block_until_ready(logits)

    # Pure-f32 JAX reference for the same (identity-routing) forward.  The kernel
    # feeds the MXU bf16 operands, so tolerance reflects bf16 rounding.
    patches_ref = extract_patches(x, patch_size)
    tok_ref = (
        patches_ref @ w_patch.reshape(embed_dim, -1).T + b_patch + pos_embed_p[None]
    )
    ref = tok_ref.mean(axis=1) @ w_head.T

    assert logits.shape == (B, num_classes), logits.shape
    assert jnp.allclose(logits, ref, atol=2e-3, rtol=2e-2), (
        float(jnp.max(jnp.abs(logits - ref)))
    )
    print("KERNEL_OK")
</pallas_src>

<mosaic_0001>
module attributes {stable_mosaic.version = 11 : i64} {
  func.func @_dna_fused_kernel(%arg0: i32, %arg1: memref<8x16x64xbf16, #tpu.memory_space<vmem>>, %arg2: memref<64x128xbf16, #tpu.memory_space<vmem>>, %arg3: memref<1x128xf32, #tpu.memory_space<vmem>>, %arg4: memref<128x128xbf16, #tpu.memory_space<vmem>>, %arg5: memref<8x128xf32, #tpu.memory_space<vmem>>) attributes {dimension_semantics = [#tpu.dimension_semantics<parallel>], iteration_bounds = array<i64: 2>, scalar_prefetch = 0 : i64, scratch_operands = 0 : i64, tpu.core_type = #tpu.core_type<tc>, window_params = [{transform_indices = @transform_0, window_bounds = array<i64: 8, 16, 64>}, {pipeline_mode = #tpu.pipeline_mode<synchronous>, transform_indices = @transform_1, window_bounds = array<i64: 64, 128>}, {pipeline_mode = #tpu.pipeline_mode<synchronous>, transform_indices = @transform_2, window_bounds = array<i64: 1, 128>}, {pipeline_mode = #tpu.pipeline_mode<synchronous>, transform_indices = @transform_3, window_bounds = array<i64: 128, 128>}, {transform_indices = @transform_4, window_bounds = array<i64: 8, 128>}]} {
    %c0 = arith.constant 0 : index
    %c0_0 = arith.constant 0 : index
    %c0_1 = arith.constant 0 : index
    %0 = vector.load %arg1[%c0, %c0_0, %c0_1] : memref<8x16x64xbf16, #tpu.memory_space<vmem>>, vector<8x16x64xbf16>
    %1 = arith.extf %0 : vector<8x16x64xbf16> to vector<8x16x64xf32>
    %cst = arith.constant dense<0.000000e+00> : vector<8x64xf32>
    %2 = vector.multi_reduction <add>, %1, %cst [1] : vector<8x16x64xf32> to vector<8x64xf32>
    %cst_2 = arith.constant 6.250000e-02 : f32
    %3 = vector.broadcast %cst_2 : f32 to vector<8x64xf32>
    %4 = arith.mulf %2, %3 : vector<8x64xf32>
    %5 = arith.truncf %4 : vector<8x64xf32> to vector<8x64xbf16>
    %c0_3 = arith.constant 0 : index
    %c0_4 = arith.constant 0 : index
    %6 = vector.load %arg2[%c0_3, %c0_4] : memref<64x128xbf16, #tpu.memory_space<vmem>>, vector<64x128xbf16>
    %cst_5 = arith.constant dense<0.000000e+00> : vector<8x128xf32>
    %7 = tpu.matmul %5, %6, %cst_5 {dimension_numbers = #tpu.dot_dimension_numbers<[1], [0], [0], [1], [0, 0, 1, 1], [], []>} : vector<8x64xbf16>, vector<64x128xbf16>, vector<8x128xf32> -> vector<8x128xf32>
    %c0_6 = arith.constant 0 : index
    %c0_7 = arith.constant 0 : index
    %8 = vector.load %arg3[%c0_6, %c0_7] : memref<1x128xf32, #tpu.memory_space<vmem>>, vector<1x128xf32>
    %9 = vector.broadcast %8 : vector<1x128xf32> to vector<8x128xf32>
    %10 = arith.addf %7, %9 : vector<8x128xf32>
    %11 = arith.truncf %10 : vector<8x128xf32> to vector<8x128xbf16>
    %c0_8 = arith.constant 0 : index
    %c0_9 = arith.constant 0 : index
    %12 = vector.load %arg4[%c0_8, %c0_9] : memref<128x128xbf16, #tpu.memory_space<vmem>>, vector<128x128xbf16>
    %cst_10 = arith.constant dense<0.000000e+00> : vector<8x128xf32>
    %13 = tpu.matmul %11, %12, %cst_10 {dimension_numbers = #tpu.dot_dimension_numbers<[1], [0], [0], [1], [0, 0, 1, 1], [], []>} : vector<8x128xbf16>, vector<128x128xbf16>, vector<8x128xf32> -> vector<8x128xf32>
    %c0_11 = arith.constant 0 : index
    %c0_12 = arith.constant 0 : index
    %14 = vector.load %arg5[%c0_11, %c0_12] : memref<8x128xf32, #tpu.memory_space<vmem>>, vector<8x128xf32>
    tpu.vector_store %arg5[%c0_11, %c0_12], %13 {strides = array<i32>} : memref<8x128xf32, #tpu.memory_space<vmem>>, vector<8x128xf32>,
    return
  }
  func.func @transform_0(%arg0: i32) -> (i32, i32, i32) {
    %c0_i32 = arith.constant 0 : i32
    %c0_i32_0 = arith.constant 0 : i32
    %c0_i32_1 = arith.constant 0 : i32
    return %arg0, %c0_i32, %c0_i32_0 : i32, i32, i32
  }
  func.func @transform_1(%arg0: i32) -> (i32, i32) {
    %c0_i32 = arith.constant 0 : i32
    %c0_i32_0 = arith.constant 0 : i32
    %c0_i32_1 = arith.constant 0 : i32
    return %c0_i32, %c0_i32_0 : i32, i32
  }
  func.func @transform_2(%arg0: i32) -> (i32, i32) {
    %c0_i32 = arith.constant 0 : i32
    %c0_i32_0 = arith.constant 0 : i32
    %c0_i32_1 = arith.constant 0 : i32
    return %c0_i32, %c0_i32_0 : i32, i32
  }
  func.func @transform_3(%arg0: i32) -> (i32, i32) {
    %c0_i32 = arith.constant 0 : i32
    %c0_i32_0 = arith.constant 0 : i32
    %c0_i32_1 = arith.constant 0 : i32
    return %c0_i32, %c0_i32_0 : i32, i32
  }
  func.func @transform_4(%arg0: i32) -> (i32, i32) {
    %c0_i32 = arith.constant 0 : i32
    %c0_i32_0 = arith.constant 0 : i32
    return %arg0, %c0_i32 : i32, i32
  }
}

</mosaic_0001>

<llo_original>
// kernel: dna_forward.1
$region0: #{dna_forward.1}
  #allocation0 [shape = 'u32[]', space=smem, size = 0x4, offset = 0x4, fixed_abs, tag = 'smem constant byte address 0x4 - core index']
  #allocation1 [shape = 'u32[144,128]{1,0:T(1,128)}', space=vmem, size = 0x12000, scoped, tag = 'internal scratch']
  %s0 = inlined_call_operand.vmem [shape: bf16[16,16,64], index: 0, kind: input, shape index: {}]
  %s1 = inlined_call_operand.vmem [shape: bf16[64,128], index: 1, kind: input, shape index: {}]
  %s2 = inlined_call_operand.vmem [shape: f32[1,128], index: 2, kind: input, shape index: {}]
  %s3 = inlined_call_operand.vmem [shape: bf16[128,128], index: 3, kind: input, shape index: {}]
  %s4 = inlined_call_operand.vmem [shape: f32[16,128], index: 4, kind: output, shape index: {}]
  %s5 = sld [smem:[#allocation0]]
  $region49: #{dna_forward.1} parent=0
    _
  %s7 = ssub.s32 1, %s5
  %s8 = scalar_select 0, %s7, %s5
  loop: start=0, step=1, limit=4
  $region2: #{dna_forward.1} parent=0 // loop_pre_header
    _
  $region3: #{dna_forward.1} parent=0 // loop_header
    %s10 = sphi 0, %s14
    %p11 = scmp.ge.s32.totalorder %s10, 4
    %s20 = sphi 0, %s22
    %s23 = sphi 0, %s20
    %s24 = sphi 0, %s23
    %s40 = sphi 0, %s24
    %s44 = sphi 0, %s44
    %s46 = sphi 0, %s44
    %s47 = sphi 0, %s46
    %s61 = sphi 0, %s47
    %s65 = sphi 0, %s65
    %s67 = sphi 0, %s65
    %s68 = sphi 0, %s67
    %s82 = sphi 0, %s68
    %s86 = sphi 0, %s86
    %s88 = sphi 0, %s86
    %s89 = sphi 0, %s88
    %s103 = sphi 0, %s89
    %s109 = sphi 0, %s111
    %s112 = sphi 0, %s109
    %s113 = sphi 0, %s112
    %s129 = sphi 0, %s113
  $region4: #{dna_forward.1} parent=0 // loop_header_branch
    %13 = sbr.rel (%p11) target = $region8
  $region5: #{dna_forward.1} parent=0 // loop_body
    %s15 = ssub.s32 %s10, 1
    %s16 = ssub.s32 %s10, 2
    %s17 = sadd.s32 %s10, 1
    %s18 = ssub.s32 %s10, %s17
    %p19 = scmp.eq.s32.totalorder %s18, 0
    %s21 = sadd.s32 %s20, 1
    %s22 = scalar_select %p19, %s20, %s21
    %p25 = pneg %p19
    %p26 = scmp.eq.s32.totalorder %s10, 1
    %p27 = por %p25, %p26
    %p28 = scmp.ne.s32.totalorder %s20, %s23
    %p29 = scmp.eq.s32.totalorder %s10, 0
    %p30 = por %p28, %p29
    %p31 = scmp.ne.s32.totalorder %s20, %s23
    %p32 = scmp.eq.s32.totalorder %s15, 1
    %p33 = por %p31, %p32
    %p34 = scmp.ne.s32.totalorder %s23, %s24
    %p35 = scmp.eq.s32.totalorder %s15, 0
    %p36 = por %p34, %p35
    %p37 = scmp.ne.s32.totalorder %s23, %s24
    %p38 = scmp.eq.s32.totalorder %s16, 1
    %p39 = por %p37, %p38
    %p41 = scmp.ne.s32.totalorder %s24, %s40
    %p42 = scmp.eq.s32.totalorder %s16, 0
    %p43 = por %p41, %p42
    %s45 = sadd.s32 %s44, 1
    %p48 = scmp.eq.s32.totalorder %s10, 1
    %p49 = scmp.ne.s32.totalorder %s44, %s46
    %p50 = scmp.eq.s32.totalorder %s10, 0
    %p51 = por %p49, %p50
    %p52 = scmp.ne.s32.totalorder %s44, %s46
    %p53 = scmp.eq.s32.totalorder %s15, 1
    %p54 = por %p52, %p53
    %p55 = scmp.ne.s32.totalorder %s46, %s47
    %p56 = scmp.eq.s32.totalorder %s15, 0
    %p57 = por %p55, %p56
    %p58 = scmp.ne.s32.totalorder %s46, %s47
    %p59 = scmp.eq.s32.totalorder %s16, 1
    %p60 = por %p58, %p59
    %p62 = scmp.ne.s32.totalorder %s47, %s61
    %p63 = scmp.eq.s32.totalorder %s16, 0
    %p64 = por %p62, %p63
    %s66 = sadd.s32 %s65, 1
    %p69 = scmp.eq.s32.totalorder %s10, 1
    %p70 = scmp.ne.s32.totalorder %s65, %s67
    %p71 = scmp.eq.s32.totalorder %s10, 0
    %p72 = por %p70, %p71
    %p73 = scmp.ne.s32.totalorder %s65, %s67
    %p74 = scmp.eq.s32.totalorder %s15, 1
    %p75 = por %p73, %p74
    %p76 = scmp.ne.s32.totalorder %s67, %s68
    %p77 = scmp.eq.s32.totalorder %s15, 0
    %p78 = por %p76, %p77
    %p79 = scmp.ne.s32.totalorder %s67, %s68
    %p80 = scmp.eq.s32.totalorder %s16, 1
    %p81 = por %p79, %p80
    %p83 = scmp.ne.s32.totalorder %s68, %s82
    %p84 = scmp.eq.s32.totalorder %s16, 0
    %p85 = por %p83, %p84
    %s87 = sadd.s32 %s86, 1
    %p90 = scmp.eq.s32.totalorder %s10, 1
    %p91 = scmp.ne.s32.totalorder %s86, %s88
    %p92 = scmp.eq.s32.totalorder %s10, 0
    %p93 = por %p91, %p92
    %p94 = scmp.ne.s32.totalorder %s86, %s88
    %p95 = scmp.eq.s32.totalorder %s15, 1
    %p96 = por %p94, %p95
    %p97 = scmp.ne.s32.totalorder %s88, %s89
    %p98 = scmp.eq.s32.totalorder %s15, 0
    %p99 = por %p97, %p98
    %p100 = scmp.ne.s32.totalorder %s88, %s89
    %p101 = scmp.eq.s32.totalorder %s16, 1
    %p102 = por %p100, %p101
    %p104 = scmp.ne.s32.totalorder %s89, %s103
    %p105 = scmp.eq.s32.totalorder %s16, 0
    %p106 = por %p104, %p105
    %s107 = ssub.s32 %s10, %s17
    %p108 = scmp.eq.s32.totalorder %s107, 0
    %s110 = sadd.s32 %s109, 1
    %s111 = scalar_select %p108, %s109, %s110
    %p114 = pneg %p108
    %p115 = scmp.eq.s32.totalorder %s10, 1
    %p116 = por %p114, %p115
    %p117 = scmp.ne.s32.totalorder %s109, %s112
    %p118 = scmp.eq.s32.totalorder %s10, 0
    %p119 = por %p117, %p118
    %p120 = scmp.ne.s32.totalorder %s109, %s112
    %p121 = scmp.eq.s32.totalorder %s15, 1
    %p122 = por %p120, %p121
    %p123 = scmp.ne.s32.totalorder %s112, %s113
    %p124 = scmp.eq.s32.totalorder %s15, 0
    %p125 = por %p123, %p124
    %p126 = scmp.ne.s32.totalorder %s112, %s113
    %p127 = scmp.eq.s32.totalorder %s16, 1
    %p128 = por %p126, %p127
    %p130 = scmp.ne.s32.totalorder %s113, %s129
    %p131 = scmp.eq.s32.totalorder %s16, 0
    %p132 = por %p130, %p131
    %p133 = scmp.le.s32.totalorder 1, %s10
    %p134 = scmp.lt.s32.totalorder %s10, 3
    %p135 = pnand %p133, %p134
    %p136 = pneg %p135
    // Predicated region
    $region9: #{dna_forward.1} parent=5 // pred_check
      _
    $region10: #{dna_forward.1} parent=5 // pred_check_branch
      %138 = sbr.rel (%p135) target = $region12
    $region11: #{dna_forward.1} parent=5 // pred_region
      %s139 = ssub.s32 %s10, 1
      // Predicated region
      $region13: #{dna_forward.1} parent=11 // pred_check
        %p140 = pneg %p57
      $region14: #{dna_forward.1} parent=11 // pred_check_branch
        %142 = sbr.rel (%p140) target = $region16
      $region15: #{dna_forward.1} parent=11 // pred_region
        _
      $region16: #{dna_forward.1} parent=11 // pred_fallthru
        _
      // Predicated region
      $region17: #{dna_forward.1} parent=11 // pred_check
        %p143 = pneg %p78
      $region18: #{dna_forward.1} parent=11 // pred_check_branch
        %145 = sbr.rel (%p143) target = $region20
      $region19: #{dna_forward.1} parent=11 // pred_region
        _
      $region20: #{dna_forward.1} parent=11 // pred_fallthru
        _
      // Predicated region
      $region21: #{dna_forward.1} parent=11 // pred_check
        %p146 = pneg %p99
      $region22: #{dna_forward.1} parent=11 // pred_check_branch
        %148 = sbr.rel (%p146) target = $region24
      $region23: #{dna_forward.1} parent=11 // pred_region
        _
      $region24: #{dna_forward.1} parent=11 // pred_fallthru
        _
    $region12: #{dna_forward.1} parent=5 // pred_fallthru
      _
    %p149 = scmp.lt.s32.totalorder %s10, 2
    // Predicated region
    $region25: #{dna_forward.1} parent=5 // pred_check
      %p150 = pneg %p149
    $region26: #{dna_forward.1} parent=5 // pred_check_branch
      %152 = sbr.rel (%p150) target = $region28
    $region27: #{dna_forward.1} parent=5 // pred_region
      // Predicated region
      $region29: #{dna_forward.1} parent=27 // pred_check
        %p153 = pneg %p30
      $region30: #{dna_forward.1} parent=27 // pred_check_branch
        %155 = sbr.rel (%p153) target = $region32
      $region31: #{dna_forward.1} parent=27 // pred_region
        %s156 = smul.u32 8, %s10
        %p157 = scmp.lt.s32.totalorder %s156, 15
        %s158 = scalar_select %p157, %s156, 15
        %s159 = smul.addr %s158, 2
        %s160 = smul.addr %s159, 4
        %s161 = scalar_lea.vmem %s0, %s160
        %s162 = smul.u32 8, %s10
      $region32: #{dna_forward.1} parent=27 // pred_fallthru
        _
    $region28: #{dna_forward.1} parent=5 // pred_fallthru
      _
    %p163 = scmp.le.s32.totalorder 1, %s10
    %p164 = scmp.lt.s32.totalorder %s10, 3
    %p165 = pnand %p163, %p164
    %p166 = pneg %p165
    // Predicated region
    $region33: #{dna_forward.1} parent=5 // pred_check
      _
    $region34: #{dna_forward.1} parent=5 // pred_check_branch
      %168 = sbr.rel (%p165) target = $region36
    $region35: #{dna_forward.1} parent=5 // pred_region
      %s169 = ssub.s32 %s10, 1
      %s170 = smul.u32 8, %s15
      %p171 = scmp.lt.s32.totalorder %s170, 15
      %s172 = scalar_select %p171, %s170, 15
      %s173 = smul.addr %s172, 2
      %s174 = smul.addr %s173, 4
      %s175 = scalar_lea.vmem %s0, %s174
      %p176 = pneg %p36
      %p177 = pneg %p33
      %p178 = pneg %p57
      %p179 = pneg %p54
      %p180 = pneg %p78
      %p181 = pneg %p75
      %p182 = pneg %p99
      %p183 = pneg %p96
      %p184 = pneg %p125
      %p185 = pneg %p122
      %p186 = scmp.lt.s32.totalorder %s15, 1
      %s187 = scalar_select %p186, %s15, 1
      %s188 = smul.addr %s187, 8
      %s189 = scalar_lea.vmem %s4, %s188
      %s190 = smul.u32 8, %s15
      %p191 = scmp.lt.s32.totalorder %s190, 15
      %s192 = scalar_select %p191, %s190, 15
      %s193 = smul.addr %s192, 2
      %s194 = smul.addr %s193, 4
      %s195 = scalar_lea.vmem %s0, %s194
      %s196 = smul.u32 8, %s15
      %p197 = scmp.lt.s32.totalorder %s15, 1
      %s198 = scalar_select %p197, %s15, 1
      %s199 = smul.addr %s198, 8
      %s200 = scalar_lea.vmem %s4, %s199
      %v202 = vld [vmem:[%s195] sm:$0xf]
      %v203 = vld [vmem:[%s195 + $0x4] sm:$0xf]
      %v204 = vld [vmem:[%s195 + $0x8] sm:$0xf]
      %v205 = vld [vmem:[%s195 + $0xc] sm:$0xf]
      %v206 = vld [vmem:[%s195 + $0x10] sm:$0xf]
      %v207 = vld [vmem:[%s195 + $0x14] sm:$0xf]
      %v208 = vld [vmem:[%s195 + $0x18] sm:$0xf]
      %v209 = vld [vmem:[%s195 + $0x1c] sm:$0xf]
      %v210 = vld [vmem:[%s195 + $0x20] sm:$0xf]
      %v211 = vld [vmem:[%s195 + $0x24] sm:$0xf]
      %v212 = vld [vmem:[%s195 + $0x28] sm:$0xf]
      %v213 = vld [vmem:[%s195 + $0x2c] sm:$0xf]
      %v214 = vld [vmem:[%s195 + $0x30] sm:$0xf]
      %v215 = vld [vmem:[%s195 + $0x34] sm:$0xf]
      %v216 = vld [vmem:[%s195 + $0x38] sm:$0xf]
      %v217 = vld [vmem:[%s195 + $0x3c] sm:$0xf]
      %v218 = vunpack.c.l.bf16 %v202
      %v219 = vunpack.c.l.bf16 %v203
      %v220 = vunpack.c.l.bf16 %v204
      %v221 = vunpack.c.l.bf16 %v205
      %v222 = vunpack.c.l.bf16 %v206
      %v223 = vunpack.c.l.bf16 %v207
      %v224 = vunpack.c.l.bf16 %v208
      %v225 = vunpack.c.l.bf16 %v209
      %v226 = vunpack.c.l.bf16 %v210
      %v227 = vunpack.c.l.bf16 %v211
      %v228 = vunpack.c.l.bf16 %v212
      %v229 = vunpack.c.l.bf16 %v213
      %v230 = vunpack.c.l.bf16 %v214
      %v231 = vunpack.c.l.bf16 %v215
      %v232 = vunpack.c.l.bf16 %v216
      %v233 = vunpack.c.l.bf16 %v217
      %vm234 = vcmask 523264
      %v235 = vsel %vm234, %v218, 0.0
      %v236 = vsel %vm234, %v219, 0.0
      %v237 = vadd.f32 %v235, %v236
      %v238 = vrot.slane %v237, 4
      %v239 = vadd.f32 %v237, %v238
      %v240 = vrot.slane %v239, 2
      %v241 = vadd.f32 %v239, %v240
      %v242 = vrot.slane %v241, 1
      %v243 = vadd.f32 %v241, %v242
      %v244 = vsel %vm234, %v220, 0.0
      %v245 = vsel %vm234, %v221, 0.0
      %v246 = vadd.f32 %v244, %v245
      %v247 = vrot.slane %v246, 4
      %v248 = vadd.f32 %v246, %v247
      %v249 = vrot.slane %v248, 2
      %v250 = vadd.f32 %v248, %v249
      %v251 = vrot.slane %v250, 1
      %v252 = vadd.f32 %v250, %v251
      %v253 = vsel %vm234, %v222, 0.0
      %v254 = vsel %vm234, %v223, 0.0
      %v255 = vadd.f32 %v253, %v254
      %v256 = vrot.slane %v255, 4
      %v257 = vadd.f32 %v255, %v256
      %v258 = vrot.slane %v257, 2
      %v259 = vadd.f32 %v257, %v258
      %v260 = vrot.slane %v259, 1
      %v261 = vadd.f32 %v259, %v260
      %v262 = vsel %vm234, %v224, 0.0
      %v263 = vsel %vm234, %v225, 0.0
      %v264 = vadd.f32 %v262, %v263
      %v265 = vrot.slane %v264, 4
      %v266 = vadd.f32 %v264, %v265
      %v267 = vrot.slane %v266, 2
      %v268 = vadd.f32 %v266, %v267
      %v269 = vrot.slane %v268, 1
      %v270 = vadd.f32 %v268, %v269
      %v271 = vsel %vm234, %v226, 0.0
      %v272 = vsel %vm234, %v227, 0.0
      %v273 = vadd.f32 %v271, %v272
      %v274 = vrot.slane %v273, 4
      %v275 = vadd.f32 %v273, %v274
      %v276 = vrot.slane %v275, 2
      %v277 = vadd.f32 %v275, %v276
      %v278 = vrot.slane %v277, 1
      %v279 = vadd.f32 %v277, %v278
      %v280 = vsel %vm234, %v228, 0.0
      %v281 = vsel %vm234, %v229, 0.0
      %v282 = vadd.f32 %v280, %v281
      %v283 = vrot.slane %v282, 4
      %v284 = vadd.f32 %v282, %v283
      %v285 = vrot.slane %v284, 2
      %v286 = vadd.f32 %v284, %v285
      %v287 = vrot.slane %v286, 1
      %v288 = vadd.f32 %v286, %v287
      %v289 = vsel %vm234, %v230, 0.0
      %v290 = vsel %vm234, %v231, 0.0
      %v291 = vadd.f32 %v289, %v290
      %v292 = vrot.slane %v291, 4
      %v293 = vadd.f32 %v291, %v292
      %v294 = vrot.slane %v293, 2
      %v295 = vadd.f32 %v293, %v294
      %v296 = vrot.slane %v295, 1
      %v297 = vadd.f32 %v295, %v296
      %v298 = vsel %vm234, %v232, 0.0
      %v299 = vsel %vm234, %v233, 0.0
      %v300 = vadd.f32 %v298, %v299
      %v301 = vrot.slane %v300, 4
      %v302 = vadd.f32 %v300, %v301
      %v303 = vrot.slane %v302, 2
      %v304 = vadd.f32 %v302, %v303
      %v305 = vrot.slane %v304, 1
      %v306 = vadd.f32 %v304, %v305
      %v307 = vmul.f32 %v243, 0.0625
      %v308 = vmul.f32 %v252, 0.0625
      %v309 = vmul.f32 %v261, 0.0625
      %v310 = vmul.f32 %v270, 0.0625
      %v311 = vmul.f32 %v279, 0.0625
      %v312 = vmul.f32 %v288, 0.0625
      %v313 = vmul.f32 %v297, 0.0625
      %v314 = vmul.f32 %v306, 0.0625
      %v315 = vpack.c.bf16 %v307, %v307
      %v316 = vpack.c.bf16 %v308, %v308
      %v317 = vpack.c.bf16 %v309, %v309
      %v318 = vpack.c.bf16 %v310, %v310
      %v319 = vpack.c.bf16 %v311, %v311
      %v320 = vpack.c.bf16 %v312, %v312
      %v321 = vpack.c.bf16 %v313, %v313
      %v322 = vpack.c.bf16 %v314, %v314
      %v323 = vld [vmem:[%s1] sm:$0xf]
      %v324 = vld [vmem:[%s1 + $0x4] sm:$0xf]
      %v325 = vld [vmem:[%s1 + $0x8] sm:$0xf]
      %v326 = vld [vmem:[%s1 + $0xc] sm:$0xf]
      %v327 = vld [vmem:[%s1 + $0x10] sm:$0xf]
      %v328 = vld [vmem:[%s1 + $0x14] sm:$0xf]
      %v329 = vld [vmem:[%s1 + $0x18] sm:$0xf]
      %v330 = vld [vmem:[%s1 + $0x1c] sm:$0xf]
      %v331 = vld [vmem:[%s2] sm:$0x1]
      %v333 = vlaneseq
      %v334 = vshrl.u32 %v333, 7
      %v335 = vsub.s32 0, %v334
      %v336 = vrot.slane %v331, %v335
      %v346 = vunpack.c.l.b16 %v315
      %v347 = vunpack.c.l.b16 %v316
      %v348 = vunpack.c.l.b16 %v317
      %v349 = vunpack.c.l.b16 %v318
      %v350 = vunpack.c.l.b16 %v319
      %v351 = vunpack.c.l.b16 %v320
      %v352 = vunpack.c.l.b16 %v321
      %v353 = vunpack.c.l.b16 %v322
      %vm354 = vcmask 1041409
      %v355 = vsel %vm354, %v347, %v346
      %vm356 = vcmask 1042434
      %v357 = vsel %vm356, %v348, %v355
      %vm358 = vcmask 1043459
      %v359 = vsel %vm358, %v349, %v357
      %vm360 = vcmask 1044484
      %v361 = vsel %vm360, %v350, %v359
      %vm362 = vcmask 1045509
      %v363 = vsel %vm362, %v351, %v361
      %vm364 = vcmask 1046534
      %v365 = vsel %vm364, %v352, %v363
      %vm366 = vcmask 1047559
      %v367 = vsel %vm366, %v353, %v365
      %v368 = vpack.c.b16 %v367, %v367
      %v377 = vunpack.c.l.b16 %v323
      %v378 = vunpack.c.l.b16 %v324
      %v379 = vunpack.c.l.b16 %v325
      %v380 = vunpack.c.l.b16 %v326
      %v381 = vunpack.c.l.b16 %v327
      %v382 = vunpack.c.l.b16 %v328
      %v383 = vunpack.c.l.b16 %v329
      %v384 = vunpack.c.l.b16 %v330
      %v385 = vpack.c.b16 %v378, %v377
      %v386 = vpack.c.b16 %v380, %v379
      %v387 = vpack.c.b16 %v382, %v381
      %v388 = vpack.c.b16 %v384, %v383
      %v394 = vsel %vm234, %v368, 0
      %396 = vmatprep.subr.bf16.mxu0 0
      %397 = vmatpush1.bf16.msra.mxu0 %v385
      %398 = vmatprep.subr.bf16.mxu0 0
      %399 = vmatpush1.bf16.msra.mxu0 %v386
      %400 = vmatprep.subr.bf16.mxu0 0
      %401 = vmatpush1.bf16.msra.mxu0 %v387
      %402 = vmatprep.subr.bf16.mxu0 0
      %403 = vmatpush1.bf16.msra.mxu0 %v388
      %404 = vmatprep.subr.bf16.mxu0 0
      %405 = vmatpush1.bf16.msra.mxu0 0
      %406 = vmatprep.subr.bf16.mxu0 0
      %407 = vmatpush1.bf16.msra.mxu0 0
      %408 = vmatprep.subr.bf16.mxu0 0
      %409 = vmatpush1.bf16.msra.mxu0 0
      %410 = vmatprep.subr.bf16.mxu0 0
      %411 = vmatpush1.bf16.msra.mxu0 0
      %412 = vmatprep.subr.bf16.mxu0 0
      %413 = vmatpush1.bf16.msra.mxu0 0
      %414 = vmatprep.subr.bf16.mxu0 0
      %415 = vmatpush1.bf16.msra.mxu0 0
      %416 = vmatprep.subr.bf16.mxu0 0
      %417 = vmatpush1.bf16.msra.mxu0 0
      %418 = vmatprep.subr.bf16.mxu0 0
      %419 = vmatpush1.bf16.msra.mxu0 0
      %420 = vmatprep.subr.bf16.mxu0 0
      %421 = vmatpush1.bf16.msra.mxu0 0
      %422 = vmatprep.subr.bf16.mxu0 0
      %423 = vmatpush1.bf16.msra.mxu0 0
      %424 = vmatprep.subr.bf16.mxu0 0
      %425 = vmatpush1.bf16.msra.mxu0 0
      %426 = vmatprep.subr.bf16.mxu0 0
      %427 = vmatpush1.bf16.msra.mxu0 0
      %428 = vmatprep.mubr.bf16.mxu0 0
      %429 = vmatmul.mubr.bf16.gmra.mrb[0].mxu0 %v394
      %v430 = vpop.f32.mrb[0].mxu0
      %v431 = vadd.f32 %v336, %v430
      %v432 = vpop.f32.mrb[0].mxu0
      %v433 = vpop.f32.mrb[0].mxu0
      %v434 = vpop.f32.mrb[0].mxu0
      %435 = vdwg.mxu0
      %v436 = vpack.c.bf16 %v431, %v431
      %v437 = vld [vmem:[%s3] sm:$0xf]
      %v438 = vld [vmem:[%s3 + $0x4] sm:$0xf]
      %v439 = vld [vmem:[%s3 + $0x8] sm:$0xf]
      %v440 = vld [vmem:[%s3 + $0xc] sm:$0xf]
      %v441 = vld [vmem:[%s3 + $0x10] sm:$0xf]
      %v442 = vld [vmem:[%s3 + $0x14] sm:$0xf]
      %v443 = vld [vmem:[%s3 + $0x18] sm:$0xf]
      %v444 = vld [vmem:[%s3 + $0x1c] sm:$0xf]
      %v445 = vld [vmem:[%s3 + $0x20] sm:$0xf]
      %v446 = vld [vmem:[%s3 + $0x24] sm:$0xf]
      %v447 = vld [vmem:[%s3 + $0x28] sm:$0xf]
      %v448 = vld [vmem:[%s3 + $0x2c] sm:$0xf]
      %v449 = vld [vmem:[%s3 + $0x30] sm:$0xf]
      %v450 = vld [vmem:[%s3 + $0x34] sm:$0xf]
      %v451 = vld [vmem:[%s3 + $0x38] sm:$0xf]
      %v452 = vld [vmem:[%s3 + $0x3c] sm:$0xf]
      %v469 = vunpack.c.l.b16 %v437
      %v470 = vunpack.c.l.b16 %v438
      %v471 = vunpack.c.l.b16 %v439
      %v472 = vunpack.c.l.b16 %v440
      %v473 = vunpack.c.l.b16 %v441
      %v474 = vunpack.c.l.b16 %v442
      %v475 = vunpack.c.l.b16 %v443
      %v476 = vunpack.c.l.b16 %v444
      %v477 = vunpack.c.l.b16 %v445
      %v478 = vunpack.c.l.b16 %v446
      %v479 = vunpack.c.l.b16 %v447
      %v480 = vunpack.c.l.b16 %v448
      %v481 = vunpack.c.l.b16 %v449
      %v482 = vunpack.c.l.b16 %v450
      %v483 = vunpack.c.l.b16 %v451
      %v484 = vunpack.c.l.b16 %v452
      %v485 = vpack.c.b16 %v470, %v469
      %v486 = vpack.c.b16 %v472, %v471
      %v487 = vpack.c.b16 %v474, %v473
      %v488 = vpack.c.b16 %v476, %v475
      %v489 = vpack.c.b16 %v478, %v477
      %v490 = vpack.c.b16 %v480, %v479
      %v491 = vpack.c.b16 %v482, %v481
      %v492 = vpack.c.b16 %v484, %v483
      %501 = vmatprep.subr.bf16.mxu0 0
      %502 = vmatpush1.bf16.msra.mxu0 %v485
      %503 = vmatprep.subr.bf16.mxu0 0
      %504 = vmatpush1.bf16.msra.mxu0 %v486
      %505 = vmatprep.subr.bf16.mxu0 0
      %506 = vmatpush1.bf16.msra.mxu0 %v487
      %507 = vmatprep.subr.bf16.mxu0 0
      %508 = vmatpush1.bf16.msra.mxu0 %v488
      %509 = vmatprep.subr.bf16.mxu0 0
      %510 = vmatpush1.bf16.msra.mxu0 %v489
      %511 = vmatprep.subr.bf16.mxu0 0
      %512 = vmatpush1.bf16.msra.mxu0 %v490
      %513 = vmatprep.subr.bf16.mxu0 0
      %514 = vmatpush1.bf16.msra.mxu0 %v491
      %515 = vmatprep.subr.bf16.mxu0 0
      %516 = vmatpush1.bf16.msra.mxu0 %v492
      %517 = vmatprep.subr.bf16.mxu0 0
      %518 = vmatpush1.bf16.msra.mxu0 0
      %519 = vmatprep.subr.bf16.mxu0 0
      %520 = vmatpush1.bf16.msra.mxu0 0
      %521 = vmatprep.subr.bf16.mxu0 0
      %522 = vmatpush1.bf16.msra.mxu0 0
      %523 = vmatprep.subr.bf16.mxu0 0
      %524 = vmatpush1.bf16.msra.mxu0 0
      %525 = vmatprep.subr.bf16.mxu0 0
      %526 = vmatpush1.bf16.msra.mxu0 0
      %527 = vmatprep.subr.bf16.mxu0 0
      %528 = vmatpush1.bf16.msra.mxu0 0
      %529 = vmatprep.subr.bf16.mxu0 0
      %530 = vmatpush1.bf16.msra.mxu0 0
      %531 = vmatprep.subr.bf16.mxu0 0
      %532 = vmatpush1.bf16.msra.mxu0 0
      %533 = vmatprep.mubr.bf16.mxu0 0
      %534 = vmatmul.mubr.bf16.gmra.mrb[0].mxu0 %v436
      %v535 = vpop.f32.mrb[0].mxu0
      %v536 = vadd.f32 0.0, %v535
      %v537 = vpop.f32.mrb[0].mxu0
      %v538 = vpop.f32.mrb[0].mxu0
      %v539 = vpop.f32.mrb[0].mxu0
      %540 = vdwg.mxu0
      %541 = vst [vmem:[%s200] sm:$0xff] %v536
      %p542 = scmp.lt.s32.totalorder %s15, 1
      %s543 = scalar_select %p542, %s15, 1
      %s544 = smul.addr %s543, 8
      %s545 = scalar_lea.vmem %s4, %s544
      // Predicated region
      $region37: #{dna_forward.1} parent=35 // pred_check
        %p546 = pneg %p122
      $region38: #{dna_forward.1} parent=35 // pred_check_branch
        %548 = sbr.rel (%p546) target = $region40
      $region39: #{dna_forward.1} parent=35 // pred_region
        _
      $region40: #{dna_forward.1} parent=35 // pred_fallthru
        _
    $region36: #{dna_forward.1} parent=5 // pred_fallthru
      _
    %p549 = scmp.le.s32.totalorder 2, %s10
    // Predicated region
    $region41: #{dna_forward.1} parent=5 // pred_check
      %p550 = pneg %p549
    $region42: #{dna_forward.1} parent=5 // pred_check_branch
      %552 = sbr.rel (%p550) target = $region44
    $region43: #{dna_forward.1} parent=5 // pred_region
      %s553 = ssub.s32 %s10, 2
      // Predicated region
      $region45: #{dna_forward.1} parent=43 // pred_check
        %p554 = pneg %p128
      $region46: #{dna_forward.1} parent=43 // pred_check_branch
        %556 = sbr.rel (%p554) target = $region48
      $region47: #{dna_forward.1} parent=43 // pred_region
        %p557 = scmp.lt.s32.totalorder %s16, 1
        %s558 = scalar_select %p557, %s16, 1
        %s559 = smul.addr %s558, 8
        %s560 = scalar_lea.vmem %s4, %s559
      $region48: #{dna_forward.1} parent=43 // pred_fallthru
        _
    $region44: #{dna_forward.1} parent=5 // pred_fallthru
      _
  $region6: #{dna_forward.1} parent=0 // loop_footer
    %s14 = sadd.s32 1, %s10
  $region7: #{dna_forward.1} parent=0 // loop_footer_branch
    %9 = sbr.rel target = $region3
  $region8: #{dna_forward.1} parent=0 // loop_exit
    _

</llo_original>
